<compile_context>
chip_gen: v5e
topology: v5e:2x2
jax: 0.10.0
libtpu: 0.0.40
codegen_flags: <defaults>
</compile_context>

<pallas_src>
import math
from functools import partial

import jax
import jax.numpy as jnp
from jax.experimental import pallas as pl
from jax.experimental.pallas import tpu as pltpu


# ----------------------------------------------------------------------------
# Fused per-batch-element MHSA kernel. Grid = (B,), one batch element per step.
#   x_ref   : (S, E)      tokens for this batch element (f32)
#   wq_ref  : (E, E)      Wq pre-scaled by 1/sqrt(hd), (in, out) layout
#   bq_ref  : (1, E)      bq pre-scaled (f32)
#   wkT_ref : (E, E)      Wk^T, so K^T = wkT @ x^T
#   bk_ref  : (E, 1)      bk as a column (f32)
#   wvo_ref : (H, E, E)   per-head folded Wv_h @ Wo_h
#   bvo_ref : (H, 1, E)   per-head folded bv_h @ Wo_h (f32)
#   bo_ref  : (1, E)      out-proj bias (f32)
#   o_ref   : (S, E)
# ----------------------------------------------------------------------------
def _mhsa_kernel(x_ref, wq_ref, bq_ref, wkT_ref, bk_ref, wvo_ref, bvo_ref,
                 bo_ref, o_ref, *, num_heads, head_dim, compute_dtype):
    x = x_ref[...]                                   # (S, E) f32
    S, E = x.shape
    xc = x.astype(compute_dtype)

    # Q projection (scale already folded into wq / bq). One MXU matmul, K=E.
    q = (jnp.dot(xc, wq_ref[...], preferred_element_type=jnp.float32)
         + bq_ref[...])                              # (S, E) f32

    # K^T via a single transpose of x: per-head K tiles become aligned
    # sublane slices (no per-head relayout/transpose inside the loop).
    xT = x.T.astype(compute_dtype)                   # (E, S)
    kT = (jnp.dot(wkT_ref[...], xT, preferred_element_type=jnp.float32)
          + bk_ref[...])                             # (E, S) f32

    acc = jnp.zeros((S, E), jnp.float32)
    # Static (unrolled) loop over heads; everything stays in VMEM / vregs.
    for h in range(num_heads):
        lo = h * head_dim
        qh = q[:, lo:lo + head_dim].astype(compute_dtype)     # (S, hd)
        khT = kT[lo:lo + head_dim, :].astype(compute_dtype)   # (hd, S) sublane slice
        s = jnp.dot(qh, khT, preferred_element_type=jnp.float32)  # (S, S)

        m = jnp.max(s, axis=-1, keepdims=True)
        p = jnp.exp(s - m)
        l = jnp.sum(p, axis=-1, keepdims=True)
        w = p * pl.reciprocal(l, approx=True)        # EUP reciprocal, no divide

        # Folded V + out-projection: (w @ V_h) @ Wo_h == w @ (x @ Wvo_h + bvo_h)
        vo = (jnp.dot(xc, wvo_ref[h], preferred_element_type=jnp.float32)
              + bvo_ref[h])                          # (S, E) f32, K=E contraction
        acc = acc + jnp.dot(w.astype(compute_dtype), vo.astype(compute_dtype),
                            preferred_element_type=jnp.float32)

    o_ref[...] = (acc + bo_ref[...]).astype(o_ref.dtype)


# ----------------------------------------------------------------------------
# One-time parameter preparation (weight transforms, NOT per-call wrapper ops):
#   * fold 1/sqrt(hd) into Wq, bq
#   * store Wk transposed so K^T = Wk^T @ x^T
#   * fold per-head Wv_h @ Wo_h and bv_h @ Wo_h
#   * weights optionally cast to bf16; biases stay f32
# Linear weights are given pre-transposed as (in_features, out_features).
# ----------------------------------------------------------------------------
def prepare_params(wq, bq, wk, bk, wv, bv, wo, bo, num_heads,
                   param_dtype=jnp.float32):
    E = wq.shape[0]
    hd = E // num_heads
    scale = 1.0 / math.sqrt(hd)

    wq_s = (wq * scale).astype(param_dtype)                      # (E, E)
    bq_s = (bq * scale).reshape(1, E).astype(jnp.float32)        # (1, E)

    wkT = wk.T.astype(param_dtype)                               # (E, E)
    bk_col = bk.reshape(E, 1).astype(jnp.float32)                # (E, 1)

    wv_h = wv.reshape(E, num_heads, hd).transpose(1, 0, 2)       # (H, E, hd)
    wo_h = wo.reshape(num_heads, hd, E)                          # (H, hd, E)
    wvo = jnp.einsum('hei,hio->heo', wv_h, wo_h).astype(param_dtype)   # (H, E, E)
    bvo = jnp.einsum('hi,hio->ho', bv.reshape(num_heads, hd), wo_h)    # (H, E)
    bvo = bvo.reshape(num_heads, 1, E).astype(jnp.float32)       # (H, 1, E)

    bo2 = bo.reshape(1, E).astype(jnp.float32)                   # (1, E)

    return dict(wq_s=wq_s, bq_s=bq_s, wkT=wkT, bk_col=bk_col,
                wvo=wvo, bvo=bvo, bo=bo2)


def multi_head_self_attention(x, params, num_heads):
    """x: (B, S, E) -> (B, S, E). Grid over batch, 'parallel' for megacore."""
    B, S, E = x.shape
    assert E % num_heads == 0
    hd = E // num_heads
    H = num_heads
    compute_dtype = params['wq_s'].dtype

    kernel = partial(_mhsa_kernel, num_heads=H, head_dim=hd,
                     compute_dtype=compute_dtype)

    out = pl.pallas_call(
        kernel,
        out_shape=jax.ShapeDtypeStruct((B, S, E), x.dtype),
        grid=(B,),
        in_specs=[
            pl.BlockSpec((None, S, E), lambda b: (b, 0, 0)),     # x (per-batch)
            pl.BlockSpec((E, E), lambda b: (0, 0)),              # wq_s
            pl.BlockSpec((1, E), lambda b: (0, 0)),              # bq_s
            pl.BlockSpec((E, E), lambda b: (0, 0)),              # wkT
            pl.BlockSpec((E, 1), lambda b: (0, 0)),              # bk_col
            pl.BlockSpec((H, E, E), lambda b: (0, 0, 0)),        # wvo
            pl.BlockSpec((H, 1, E), lambda b: (0, 0, 0)),        # bvo
            pl.BlockSpec((1, E), lambda b: (0, 0)),              # bo
        ],
        out_specs=pl.BlockSpec((None, S, E), lambda b: (b, 0, 0)),
        compiler_params=pltpu.CompilerParams(
            dimension_semantics=("parallel",)),
    )(x, params['wq_s'], params['bq_s'], params['wkT'], params['bk_col'],
      params['wvo'], params['bvo'], params['bo'])

    return out


# ----------------------------------------------------------------------------
# Pure-JAX reference (mirrors the PyTorch module) for correctness checking.
# ----------------------------------------------------------------------------
def mhsa_reference(x, wq, bq, wk, bk, wv, bv, wo, bo, num_heads):
    B, S, E = x.shape
    hd = E // num_heads
    q = x @ wq + bq
    k = x @ wk + bk
    v = x @ wv + bv

    def split(t):
        return t.reshape(B, S, num_heads, hd).transpose(0, 2, 1, 3)

    q, k, v = split(q), split(k), split(v)
    s = jnp.einsum('bhqd,bhkd->bhqk', q, k) / math.sqrt(hd)
    w = jax.nn.softmax(s, axis=-1)
    o = jnp.einsum('bhqk,bhkd->bhqd', w, v)
    o = o.transpose(0, 2, 1, 3).reshape(B, S, E)
    return o @ wo + bo


if __name__ == "__main__":
    key = jax.random.PRNGKey(0)
    kx, kq, kk, kv, ko = jax.random.split(key, 5)

    B, S, E, H = 2, 8, 32, 4
    x = jax.random.normal(kx, (B, S, E), jnp.float32)

    def lin(k, fan_in, fan_out):
        kw, kb = jax.random.split(k)
        w = jax.random.normal(kw, (fan_in, fan_out), jnp.float32) / math.sqrt(fan_in)
        b = jax.random.normal(kb, (fan_out,), jnp.float32) * 0.02
        return w, b

    wq, bq = lin(kq, E, E)
    wk, bk = lin(kk, E, E)
    wv, bv = lin(kv, E, E)
    wo, bo = lin(ko, E, E)

    ref = mhsa_reference(x, wq, bq, wk, bk, wv, bv, wo, bo, H)

    # f32 matmul operands: tight check.
    params_f32 = prepare_params(wq, bq, wk, bk, wv, bv, wo, bo, H, jnp.float32)
    out_f32 = multi_head_self_attention(x, params_f32, H)

    # bf16 matmul operands (f32 accumulation / softmax): loose check.
    params_bf16 = prepare_params(wq, bq, wk, bk, wv, bv, wo, bo, H, jnp.bfloat16)
    out_bf16 = multi_head_self_attention(x, params_bf16, H)

    jax.block_until_ready((ref, out_f32, out_bf16))

    assert out_f32.shape == (B, S, E)
    err_f32 = float(jnp.max(jnp.abs(out_f32 - ref)))
    err_bf16 = float(jnp.max(jnp.abs(out_bf16 - ref)))
    assert jnp.allclose(out_f32, ref, atol=5e-3, rtol=5e-3), f"f32 max_err={err_f32}"
    assert jnp.allclose(out_bf16, ref, atol=1e-1, rtol=1e-1), f"bf16 max_err={err_bf16}"
    print("KERNEL_OK")
</pallas_src>

<mosaic_0001>
module attributes {stable_mosaic.version = 11 : i64} {
  func.func @_mhsa_kernel(%arg0: i32, %arg1: memref<1x8x32xf32, #tpu.memory_space<vmem>>, %arg2: memref<32x32xf32, #tpu.memory_space<vmem>>, %arg3: memref<1x32xf32, #tpu.memory_space<vmem>>, %arg4: memref<32x32xf32, #tpu.memory_space<vmem>>, %arg5: memref<32x1xf32, #tpu.memory_space<vmem>>, %arg6: memref<4x32x32xf32, #tpu.memory_space<vmem>>, %arg7: memref<4x1x32xf32, #tpu.memory_space<vmem>>, %arg8: memref<1x32xf32, #tpu.memory_space<vmem>>, %arg9: memref<1x8x32xf32, #tpu.memory_space<vmem>>) attributes {dimension_semantics = [#tpu.dimension_semantics<parallel>], iteration_bounds = array<i64: 2>, scalar_prefetch = 0 : i64, scratch_operands = 0 : i64, tpu.core_type = #tpu.core_type<tc>, window_params = [{transform_indices = @transform_0, window_bounds = array<i64: 1, 8, 32>}, {pipeline_mode = #tpu.pipeline_mode<synchronous>, transform_indices = @transform_1, window_bounds = array<i64: 32, 32>}, {pipeline_mode = #tpu.pipeline_mode<synchronous>, transform_indices = @transform_2, window_bounds = array<i64: 1, 32>}, {pipeline_mode = #tpu.pipeline_mode<synchronous>, transform_indices = @transform_3, window_bounds = array<i64: 32, 32>}, {pipeline_mode = #tpu.pipeline_mode<synchronous>, transform_indices = @transform_4, window_bounds = array<i64: 32, 1>}, {pipeline_mode = #tpu.pipeline_mode<synchronous>, transform_indices = @transform_5, window_bounds = array<i64: 4, 32, 32>}, {pipeline_mode = #tpu.pipeline_mode<synchronous>, transform_indices = @transform_6, window_bounds = array<i64: 4, 1, 32>}, {pipeline_mode = #tpu.pipeline_mode<synchronous>, transform_indices = @transform_7, window_bounds = array<i64: 1, 32>}, {transform_indices = @transform_8, window_bounds = array<i64: 1, 8, 32>}]} {
    %c0 = arith.constant 0 : index
    %c0_0 = arith.constant 0 : index
    %c0_1 = arith.constant 0 : index
    %0 = vector.load %arg1[%c0, %c0_0, %c0_1] : memref<1x8x32xf32, #tpu.memory_space<vmem>>, vector<1x8x32xf32>
    %1 = vector.shape_cast %0 : vector<1x8x32xf32> to vector<8x32xf32>
    %c0_2 = arith.constant 0 : index
    %c0_3 = arith.constant 0 : index
    %2 = vector.load %arg2[%c0_2, %c0_3] : memref<32x32xf32, #tpu.memory_space<vmem>>, vector<32x32xf32>
    %cst = arith.constant dense<0.000000e+00> : vector<8x32xf32>
    %3 = tpu.matmul %1, %2, %cst {dimension_numbers = #tpu.dot_dimension_numbers<[1], [0], [0], [1], [0, 0, 1, 1], [], []>} : vector<8x32xf32>, vector<32x32xf32>, vector<8x32xf32> -> vector<8x32xf32>
    %c0_4 = arith.constant 0 : index
    %c0_5 = arith.constant 0 : index
    %4 = vector.load %arg3[%c0_4, %c0_5] : memref<1x32xf32, #tpu.memory_space<vmem>>, vector<1x32xf32>
    %5 = vector.broadcast %4 : vector<1x32xf32> to vector<8x32xf32>
    %6 = arith.addf %3, %5 : vector<8x32xf32>
    %7 = tpu.transpose %1, [1, 0] : vector<8x32xf32> -> vector<32x8xf32>
    %c0_6 = arith.constant 0 : index
    %c0_7 = arith.constant 0 : index
    %8 = vector.load %arg4[%c0_6, %c0_7] : memref<32x32xf32, #tpu.memory_space<vmem>>, vector<32x32xf32>
    %cst_8 = arith.constant dense<0.000000e+00> : vector<32x8xf32>
    %9 = tpu.matmul %8, %7, %cst_8 {dimension_numbers = #tpu.dot_dimension_numbers<[1], [0], [0], [1], [0, 0, 1, 1], [], []>} : vector<32x32xf32>, vector<32x8xf32>, vector<32x8xf32> -> vector<32x8xf32>
    %c0_9 = arith.constant 0 : index
    %c0_10 = arith.constant 0 : index
    %10 = vector.load %arg5[%c0_9, %c0_10] : memref<32x1xf32, #tpu.memory_space<vmem>>, vector<32x1xf32>
    %11 = vector.broadcast %10 : vector<32x1xf32> to vector<32x8xf32>
    %12 = arith.addf %9, %11 : vector<32x8xf32>
    %cst_11 = arith.constant 0.000000e+00 : f32
    %13 = vector.broadcast %cst_11 : f32 to vector<8x32xf32>
    %14 = vector.extract_strided_slice %6 {offsets = [0, 0], sizes = [8, 8], strides = [1, 1]} : vector<8x32xf32> to vector<8x8xf32>
    %15 = vector.extract_strided_slice %12 {offsets = [0, 0], sizes = [8, 8], strides = [1, 1]} : vector<32x8xf32> to vector<8x8xf32>
    %cst_12 = arith.constant dense<0.000000e+00> : vector<8x8xf32>
    %16 = tpu.matmul %14, %15, %cst_12 {dimension_numbers = #tpu.dot_dimension_numbers<[1], [0], [0], [1], [0, 0, 1, 1], [], []>} : vector<8x8xf32>, vector<8x8xf32>, vector<8x8xf32> -> vector<8x8xf32>
    %cst_13 = arith.constant dense<0xFF800000> : vector<8xf32>
    %17 = vector.multi_reduction <maximumf>, %16, %cst_13 [1] : vector<8x8xf32> to vector<8xf32>
    %18 = vector.shape_cast %17 : vector<8xf32> to vector<8x1xf32>
    %19 = vector.broadcast %18 : vector<8x1xf32> to vector<8x8xf32>
    %20 = arith.subf %16, %19 : vector<8x8xf32>
    %21 = math.exp %20 : vector<8x8xf32>
    %cst_14 = arith.constant dense<0.000000e+00> : vector<8xf32>
    %22 = vector.multi_reduction <add>, %21, %cst_14 [1] : vector<8x8xf32> to vector<8xf32>
    %23 = vector.shape_cast %22 : vector<8xf32> to vector<8x1xf32>
    %24 = tpu.reciprocal %23 {approx = true} : vector<8x1xf32> -> vector<8x1xf32>
    %25 = vector.broadcast %24 : vector<8x1xf32> to vector<8x8xf32>
    %26 = arith.mulf %21, %25 : vector<8x8xf32>
    %c0_15 = arith.constant 0 : index
    %c0_16 = arith.constant 0 : index
    %c0_17 = arith.constant 0 : index
    %27 = vector.load %arg6[%c0_15, %c0_16, %c0_17] : memref<4x32x32xf32, #tpu.memory_space<vmem>>, vector<1x32x32xf32>
    %28 = vector.shape_cast %27 : vector<1x32x32xf32> to vector<32x32xf32>
    %cst_18 = arith.constant dense<0.000000e+00> : vector<8x32xf32>
    %29 = tpu.matmul %1, %28, %cst_18 {dimension_numbers = #tpu.dot_dimension_numbers<[1], [0], [0], [1], [0, 0, 1, 1], [], []>} : vector<8x32xf32>, vector<32x32xf32>, vector<8x32xf32> -> vector<8x32xf32>
    %c0_19 = arith.constant 0 : index
    %c0_20 = arith.constant 0 : index
    %c0_21 = arith.constant 0 : index
    %30 = vector.load %arg7[%c0_19, %c0_20, %c0_21] : memref<4x1x32xf32, #tpu.memory_space<vmem>>, vector<1x1x32xf32>
    %31 = vector.shape_cast %30 : vector<1x1x32xf32> to vector<1x32xf32>
    %32 = vector.broadcast %31 : vector<1x32xf32> to vector<8x32xf32>
    %33 = arith.addf %29, %32 : vector<8x32xf32>
    %cst_22 = arith.constant dense<0.000000e+00> : vector<8x32xf32>
    %34 = tpu.matmul %26, %33, %cst_22 {dimension_numbers = #tpu.dot_dimension_numbers<[1], [0], [0], [1], [0, 0, 1, 1], [], []>} : vector<8x8xf32>, vector<8x32xf32>, vector<8x32xf32> -> vector<8x32xf32>
    %35 = arith.addf %13, %34 : vector<8x32xf32>
    %36 = vector.extract_strided_slice %6 {offsets = [0, 8], sizes = [8, 8], strides = [1, 1]} : vector<8x32xf32> to vector<8x8xf32>
    %37 = vector.extract_strided_slice %12 {offsets = [8, 0], sizes = [8, 8], strides = [1, 1]} : vector<32x8xf32> to vector<8x8xf32>
    %cst_23 = arith.constant dense<0.000000e+00> : vector<8x8xf32>
    %38 = tpu.matmul %36, %37, %cst_23 {dimension_numbers = #tpu.dot_dimension_numbers<[1], [0], [0], [1], [0, 0, 1, 1], [], []>} : vector<8x8xf32>, vector<8x8xf32>, vector<8x8xf32> -> vector<8x8xf32>
    %cst_24 = arith.constant dense<0xFF800000> : vector<8xf32>
    %39 = vector.multi_reduction <maximumf>, %38, %cst_24 [1] : vector<8x8xf32> to vector<8xf32>
    %40 = vector.shape_cast %39 : vector<8xf32> to vector<8x1xf32>
    %41 = vector.broadcast %40 : vector<8x1xf32> to vector<8x8xf32>
    %42 = arith.subf %38, %41 : vector<8x8xf32>
    %43 = math.exp %42 : vector<8x8xf32>
    %cst_25 = arith.constant dense<0.000000e+00> : vector<8xf32>
    %44 = vector.multi_reduction <add>, %43, %cst_25 [1] : vector<8x8xf32> to vector<8xf32>
    %45 = vector.shape_cast %44 : vector<8xf32> to vector<8x1xf32>
    %46 = tpu.reciprocal %45 {approx = true} : vector<8x1xf32> -> vector<8x1xf32>
    %47 = vector.broadcast %46 : vector<8x1xf32> to vector<8x8xf32>
    %48 = arith.mulf %43, %47 : vector<8x8xf32>
    %c1 = arith.constant 1 : index
    %c0_26 = arith.constant 0 : index
    %c0_27 = arith.constant 0 : index
    %49 = vector.load %arg6[%c1, %c0_26, %c0_27] : memref<4x32x32xf32, #tpu.memory_space<vmem>>, vector<1x32x32xf32>
    %50 = vector.shape_cast %49 : vector<1x32x32xf32> to vector<32x32xf32>
    %cst_28 = arith.constant dense<0.000000e+00> : vector<8x32xf32>
    %51 = tpu.matmul %1, %50, %cst_28 {dimension_numbers = #tpu.dot_dimension_numbers<[1], [0], [0], [1], [0, 0, 1, 1], [], []>} : vector<8x32xf32>, vector<32x32xf32>, vector<8x32xf32> -> vector<8x32xf32>
    %c1_29 = arith.constant 1 : index
    %c0_30 = arith.constant 0 : index
    %c0_31 = arith.constant 0 : index
    %52 = vector.load %arg7[%c1_29, %c0_30, %c0_31] : memref<4x1x32xf32, #tpu.memory_space<vmem>>, vector<1x1x32xf32>
    %53 = vector.shape_cast %52 : vector<1x1x32xf32> to vector<1x32xf32>
    %54 = vector.broadcast %53 : vector<1x32xf32> to vector<8x32xf32>
    %55 = arith.addf %51, %54 : vector<8x32xf32>
    %cst_32 = arith.constant dense<0.000000e+00> : vector<8x32xf32>
    %56 = tpu.matmul %48, %55, %cst_32 {dimension_numbers = #tpu.dot_dimension_numbers<[1], [0], [0], [1], [0, 0, 1, 1], [], []>} : vector<8x8xf32>, vector<8x32xf32>, vector<8x32xf32> -> vector<8x32xf32>
    %57 = arith.addf %35, %56 : vector<8x32xf32>
    %58 = vector.extract_strided_slice %6 {offsets = [0, 16], sizes = [8, 8], strides = [1, 1]} : vector<8x32xf32> to vector<8x8xf32>
    %59 = vector.extract_strided_slice %12 {offsets = [16, 0], sizes = [8, 8], strides = [1, 1]} : vector<32x8xf32> to vector<8x8xf32>
    %cst_33 = arith.constant dense<0.000000e+00> : vector<8x8xf32>
    %60 = tpu.matmul %58, %59, %cst_33 {dimension_numbers = #tpu.dot_dimension_numbers<[1], [0], [0], [1], [0, 0, 1, 1], [], []>} : vector<8x8xf32>, vector<8x8xf32>, vector<8x8xf32> -> vector<8x8xf32>
    %cst_34 = arith.constant dense<0xFF800000> : vector<8xf32>
    %61 = vector.multi_reduction <maximumf>, %60, %cst_34 [1] : vector<8x8xf32> to vector<8xf32>
    %62 = vector.shape_cast %61 : vector<8xf32> to vector<8x1xf32>
    %63 = vector.broadcast %62 : vector<8x1xf32> to vector<8x8xf32>
    %64 = arith.subf %60, %63 : vector<8x8xf32>
    %65 = math.exp %64 : vector<8x8xf32>
    %cst_35 = arith.constant dense<0.000000e+00> : vector<8xf32>
    %66 = vector.multi_reduction <add>, %65, %cst_35 [1] : vector<8x8xf32> to vector<8xf32>
    %67 = vector.shape_cast %66 : vector<8xf32> to vector<8x1xf32>
    %68 = tpu.reciprocal %67 {approx = true} : vector<8x1xf32> -> vector<8x1xf32>
    %69 = vector.broadcast %68 : vector<8x1xf32> to vector<8x8xf32>
    %70 = arith.mulf %65, %69 : vector<8x8xf32>
    %c2 = arith.constant 2 : index
    %c0_36 = arith.constant 0 : index
    %c0_37 = arith.constant 0 : index
    %71 = vector.load %arg6[%c2, %c0_36, %c0_37] : memref<4x32x32xf32, #tpu.memory_space<vmem>>, vector<1x32x32xf32>
    %72 = vector.shape_cast %71 : vector<1x32x32xf32> to vector<32x32xf32>
    %cst_38 = arith.constant dense<0.000000e+00> : vector<8x32xf32>
    %73 = tpu.matmul %1, %72, %cst_38 {dimension_numbers = #tpu.dot_dimension_numbers<[1], [0], [0], [1], [0, 0, 1, 1], [], []>} : vector<8x32xf32>, vector<32x32xf32>, vector<8x32xf32> -> vector<8x32xf32>
    %c2_39 = arith.constant 2 : index
    %c0_40 = arith.constant 0 : index
    %c0_41 = arith.constant 0 : index
    %74 = vector.load %arg7[%c2_39, %c0_40, %c0_41] : memref<4x1x32xf32, #tpu.memory_space<vmem>>, vector<1x1x32xf32>
    %75 = vector.shape_cast %74 : vector<1x1x32xf32> to vector<1x32xf32>
    %76 = vector.broadcast %75 : vector<1x32xf32> to vector<8x32xf32>
    %77 = arith.addf %73, %76 : vector<8x32xf32>
    %cst_42 = arith.constant dense<0.000000e+00> : vector<8x32xf32>
    %78 = tpu.matmul %70, %77, %cst_42 {dimension_numbers = #tpu.dot_dimension_numbers<[1], [0], [0], [1], [0, 0, 1, 1], [], []>} : vector<8x8xf32>, vector<8x32xf32>, vector<8x32xf32> -> vector<8x32xf32>
    %79 = arith.addf %57, %78 : vector<8x32xf32>
    %80 = vector.extract_strided_slice %6 {offsets = [0, 24], sizes = [8, 8], strides = [1, 1]} : vector<8x32xf32> to vector<8x8xf32>
    %81 = vector.extract_strided_slice %12 {offsets = [24, 0], sizes = [8, 8], strides = [1, 1]} : vector<32x8xf32> to vector<8x8xf32>
    %cst_43 = arith.constant dense<0.000000e+00> : vector<8x8xf32>
    %82 = tpu.matmul %80, %81, %cst_43 {dimension_numbers = #tpu.dot_dimension_numbers<[1], [0], [0], [1], [0, 0, 1, 1], [], []>} : vector<8x8xf32>, vector<8x8xf32>, vector<8x8xf32> -> vector<8x8xf32>
    %cst_44 = arith.constant dense<0xFF800000> : vector<8xf32>
    %83 = vector.multi_reduction <maximumf>, %82, %cst_44 [1] : vector<8x8xf32> to vector<8xf32>
    %84 = vector.shape_cast %83 : vector<8xf32> to vector<8x1xf32>
    %85 = vector.broadcast %84 : vector<8x1xf32> to vector<8x8xf32>
    %86 = arith.subf %82, %85 : vector<8x8xf32>
    %87 = math.exp %86 : vector<8x8xf32>
    %cst_45 = arith.constant dense<0.000000e+00> : vector<8xf32>
    %88 = vector.multi_reduction <add>, %87, %cst_45 [1] : vector<8x8xf32> to vector<8xf32>
    %89 = vector.shape_cast %88 : vector<8xf32> to vector<8x1xf32>
    %90 = tpu.reciprocal %89 {approx = true} : vector<8x1xf32> -> vector<8x1xf32>
    %91 = vector.broadcast %90 : vector<8x1xf32> to vector<8x8xf32>
    %92 = arith.mulf %87, %91 : vector<8x8xf32>
    %c3 = arith.constant 3 : index
    %c0_46 = arith.constant 0 : index
    %c0_47 = arith.constant 0 : index
    %93 = vector.load %arg6[%c3, %c0_46, %c0_47] : memref<4x32x32xf32, #tpu.memory_space<vmem>>, vector<1x32x32xf32>
    %94 = vector.shape_cast %93 : vector<1x32x32xf32> to vector<32x32xf32>
    %cst_48 = arith.constant dense<0.000000e+00> : vector<8x32xf32>
    %95 = tpu.matmul %1, %94, %cst_48 {dimension_numbers = #tpu.dot_dimension_numbers<[1], [0], [0], [1], [0, 0, 1, 1], [], []>} : vector<8x32xf32>, vector<32x32xf32>, vector<8x32xf32> -> vector<8x32xf32>
    %c3_49 = arith.constant 3 : index
    %c0_50 = arith.constant 0 : index
    %c0_51 = arith.constant 0 : index
    %96 = vector.load %arg7[%c3_49, %c0_50, %c0_51] : memref<4x1x32xf32, #tpu.memory_space<vmem>>, vector<1x1x32xf32>
    %97 = vector.shape_cast %96 : vector<1x1x32xf32> to vector<1x32xf32>
    %98 = vector.broadcast %97 : vector<1x32xf32> to vector<8x32xf32>
    %99 = arith.addf %95, %98 : vector<8x32xf32>
    %cst_52 = arith.constant dense<0.000000e+00> : vector<8x32xf32>
    %100 = tpu.matmul %92, %99, %cst_52 {dimension_numbers = #tpu.dot_dimension_numbers<[1], [0], [0], [1], [0, 0, 1, 1], [], []>} : vector<8x8xf32>, vector<8x32xf32>, vector<8x32xf32> -> vector<8x32xf32>
    %101 = arith.addf %79, %100 : vector<8x32xf32>
    %c0_53 = arith.constant 0 : index
    %c0_54 = arith.constant 0 : index
    %102 = vector.load %arg8[%c0_53, %c0_54] : memref<1x32xf32, #tpu.memory_space<vmem>>, vector<1x32xf32>
    %103 = vector.broadcast %102 : vector<1x32xf32> to vector<8x32xf32>
    %104 = arith.addf %101, %103 : vector<8x32xf32>
    %c0_55 = arith.constant 0 : index
    %c0_56 = arith.constant 0 : index
    %c0_57 = arith.constant 0 : index
    %105 = vector.load %arg9[%c0_55, %c0_56, %c0_57] : memref<1x8x32xf32, #tpu.memory_space<vmem>>, vector<1x8x32xf32>
    %106 = vector.shape_cast %105 : vector<1x8x32xf32> to vector<8x32xf32>
    %107 = vector.shape_cast %104 : vector<8x32xf32> to vector<1x8x32xf32>
    tpu.vector_store %arg9[%c0_55, %c0_56, %c0_57], %107 {strides = array<i32>} : memref<1x8x32xf32, #tpu.memory_space<vmem>>, vector<1x8x32xf32>,
    return
  }
  func.func @transform_0(%arg0: i32) -> (i32, i32, i32) {
    %c0_i32 = arith.constant 0 : i32
    %c0_i32_0 = arith.constant 0 : i32
    %c0_i32_1 = arith.constant 0 : i32
    return %arg0, %c0_i32, %c0_i32_0 : i32, i32, i32
  }
  func.func @transform_1(%arg0: i32) -> (i32, i32) {
    %c0_i32 = arith.constant 0 : i32
    %c0_i32_0 = arith.constant 0 : i32
    %c0_i32_1 = arith.constant 0 : i32
    return %c0_i32, %c0_i32_0 : i32, i32
  }
  func.func @transform_2(%arg0: i32) -> (i32, i32) {
    %c0_i32 = arith.constant 0 : i32
    %c0_i32_0 = arith.constant 0 : i32
    %c0_i32_1 = arith.constant 0 : i32
    return %c0_i32, %c0_i32_0 : i32, i32
  }
  func.func @transform_3(%arg0: i32) -> (i32, i32) {
    %c0_i32 = arith.constant 0 : i32
    %c0_i32_0 = arith.constant 0 : i32
    %c0_i32_1 = arith.constant 0 : i32
    return %c0_i32, %c0_i32_0 : i32, i32
  }
  func.func @transform_4(%arg0: i32) -> (i32, i32) {
    %c0_i32 = arith.constant 0 : i32
    %c0_i32_0 = arith.constant 0 : i32
    %c0_i32_1 = arith.constant 0 : i32
    return %c0_i32, %c0_i32_0 : i32, i32
  }
  func.func @transform_5(%arg0: i32) -> (i32, i32, i32) {
    %c0_i32 = arith.constant 0 : i32
    %c0_i32_0 = arith.constant 0 : i32
    %c0_i32_1 = arith.constant 0 : i32
    %c0_i32_2 = arith.constant 0 : i32
    return %c0_i32, %c0_i32_0, %c0_i32_1 : i32, i32, i32
  }
  func.func @transform_6(%arg0: i32) -> (i32, i32, i32) {
    %c0_i32 = arith.constant 0 : i32
    %c0_i32_0 = arith.constant 0 : i32
    %c0_i32_1 = arith.constant 0 : i32
    %c0_i32_2 = arith.constant 0 : i32
    return %c0_i32, %c0_i32_0, %c0_i32_1 : i32, i32, i32
  }
  func.func @transform_7(%arg0: i32) -> (i32, i32) {
    %c0_i32 = arith.constant 0 : i32
    %c0_i32_0 = arith.constant 0 : i32
    %c0_i32_1 = arith.constant 0 : i32
    return %c0_i32, %c0_i32_0 : i32, i32
  }
  func.func @transform_8(%arg0: i32) -> (i32, i32, i32) {
    %c0_i32 = arith.constant 0 : i32
    %c0_i32_0 = arith.constant 0 : i32
    %c0_i32_1 = arith.constant 0 : i32
    return %arg0, %c0_i32, %c0_i32_0 : i32, i32, i32
  }
}

</mosaic_0001>

<llo_original>
// kernel: tpu_custom_call.1
$region0: #{tpu_custom_call.1}
  #allocation0 [shape = 'u32[]', space=smem, size = 0x4, offset = 0x4, fixed_abs, tag = 'smem constant byte address 0x4 - core index']
  #allocation1 [shape = 'u32[72,128]{1,0:T(1,128)}', space=vmem, size = 0x9000, scoped, tag = 'internal scratch']
  %s0 = inlined_call_operand.hbm [shape: f32[2,8,32], index: 0, kind: input, shape index: {}]
  %s1 = inlined_call_operand.vmem [shape: f32[32,32], index: 1, kind: input, shape index: {}]
  %s2 = inlined_call_operand.vmem [shape: f32[1,32], index: 2, kind: input, shape index: {}]
  %s3 = inlined_call_operand.hbm [shape: f32[32,32], index: 3, kind: input, shape index: {}]
  %s4 = inlined_call_operand.vmem [shape: f32[32,1], index: 4, kind: input, shape index: {}]
  %s5 = inlined_call_operand.hbm [shape: f32[4,32,32], index: 5, kind: input, shape index: {}]
  %s6 = inlined_call_operand.vmem [shape: f32[4,1,32], index: 6, kind: input, shape index: {}]
  %s7 = inlined_call_operand.vmem [shape: f32[1,32], index: 7, kind: input, shape index: {}]
  %s8 = inlined_call_operand.hbm [shape: f32[2,8,32], index: 8, kind: output, shape index: {}]
  %s9 = sld [smem:[#allocation0]]
  $region77: #{tpu_custom_call.1} parent=0
    _
  %s11 = ssub.s32 1, %s9
  %s12 = scalar_select 0, %s11, %s9
  $region1: #{tpu_custom_call.1} parent=0
    #allocation2 [shape = 'u8[8192]{0}', space=vmem, size = 0x2000, scoped, tag = 'input window, operand 0']
    #allocation3 [shape = 's32[2]{0}', space=sflag, size = 0x8, scoped, tag = 'scoped memory for tpu_custom_call.1']
    #allocation4 [shape = 's32[2]{0}', space=sflag, size = 0x8, scoped, tag = 'scoped memory for tpu_custom_call.1']
    #allocation5 [shape = 'u8[16384]{0}', space=vmem, size = 0x4000, scoped, tag = 'input window, operand 3, single buffered']
    #allocation6 [shape = 's32[1]{0}', space=sflag, size = 0x4, scoped, tag = 'scoped memory for tpu_custom_call.1']
    #allocation7 [shape = 'u8[65536]{0}', space=vmem, size = 0x10000, scoped, tag = 'input window, operand 5, single buffered']
    #allocation8 [shape = 'u8[8192]{0}', space=vmem, size = 0x2000, scoped, tag = 'output window, operand 0']
    %13 = vsyncpa [#allocation3], 0
    %s14 = scalar_lea.sflag [#allocation3], 1
    %15 = vsyncpa %s14, 0
    %16 = vsyncpa [#allocation6], 0
    %17 = vsyncpa [#allocation4], 0
    %s18 = scalar_lea.sflag [#allocation4], 1
    %19 = vsyncpa %s18, 0
    loop: start=0, step=1, limit=4
    $region2: #{tpu_custom_call.1} parent=1 // loop_pre_header
      _
    $region3: #{tpu_custom_call.1} parent=1 // loop_header
      %s21 = sphi 0, %s25
      %p22 = scmp.ge.s32.totalorder %s21, 4
      %s31 = sphi 0, %s33
      %s34 = sphi 0, %s31
      %s35 = sphi 0, %s34
      %s51 = sphi 0, %s35
      %s55 = sphi 0, %s55
      %s57 = sphi 0, %s55
      %s58 = sphi 0, %s57
      %s72 = sphi 0, %s58
      %s76 = sphi 0, %s76
      %s78 = sphi 0, %s76
      %s79 = sphi 0, %s78
      %s93 = sphi 0, %s79
      %s97 = sphi 0, %s97
      %s99 = sphi 0, %s97
      %s100 = sphi 0, %s99
      %s114 = sphi 0, %s100
      %s118 = sphi 0, %s118
      %s120 = sphi 0, %s118
      %s121 = sphi 0, %s120
      %s135 = sphi 0, %s121
      %s139 = sphi 0, %s139
      %s141 = sphi 0, %s139
      %s142 = sphi 0, %s141
      %s156 = sphi 0, %s142
      %s160 = sphi 0, %s160
      %s162 = sphi 0, %s160
      %s163 = sphi 0, %s162
      %s177 = sphi 0, %s163
      %s181 = sphi 0, %s181
      %s183 = sphi 0, %s181
      %s184 = sphi 0, %s183
      %s198 = sphi 0, %s184
      %s204 = sphi 0, %s206
      %s207 = sphi 0, %s204
      %s208 = sphi 0, %s207
      %s224 = sphi 0, %s208
    $region4: #{tpu_custom_call.1} parent=1 // loop_header_branch
      %24 = sbr.rel (%p22) target = $region8
    $region5: #{tpu_custom_call.1} parent=1 // loop_body
      %s26 = ssub.s32 %s21, 1
      %s27 = ssub.s32 %s21, 2
      %s28 = sadd.s32 %s21, 1
      %s29 = ssub.s32 %s21, %s28
      %p30 = scmp.eq.s32.totalorder %s29, 0
      %s32 = sadd.s32 %s31, 1
      %s33 = scalar_select %p30, %s31, %s32
      %p36 = pneg %p30
      %p37 = scmp.eq.s32.totalorder %s21, 1
      %p38 = por %p36, %p37
      %p39 = scmp.ne.s32.totalorder %s31, %s34
      %p40 = scmp.eq.s32.totalorder %s21, 0
      %p41 = por %p39, %p40
      %p42 = scmp.ne.s32.totalorder %s31, %s34
      %p43 = scmp.eq.s32.totalorder %s26, 1
      %p44 = por %p42, %p43
      %p45 = scmp.ne.s32.totalorder %s34, %s35
      %p46 = scmp.eq.s32.totalorder %s26, 0
      %p47 = por %p45, %p46
      %p48 = scmp.ne.s32.totalorder %s34, %s35
      %p49 = scmp.eq.s32.totalorder %s27, 1
      %p50 = por %p48, %p49
      %p52 = scmp.ne.s32.totalorder %s35, %s51
      %p53 = scmp.eq.s32.totalorder %s27, 0
      %p54 = por %p52, %p53
      %s56 = sadd.s32 %s55, 1
      %p59 = scmp.eq.s32.totalorder %s21, 1
      %p60 = scmp.ne.s32.totalorder %s55, %s57
      %p61 = scmp.eq.s32.totalorder %s21, 0
      %p62 = por %p60, %p61
      %p63 = scmp.ne.s32.totalorder %s55, %s57
      %p64 = scmp.eq.s32.totalorder %s26, 1
      %p65 = por %p63, %p64
      %p66 = scmp.ne.s32.totalorder %s57, %s58
      %p67 = scmp.eq.s32.totalorder %s26, 0
      %p68 = por %p66, %p67
      %p69 = scmp.ne.s32.totalorder %s57, %s58
      %p70 = scmp.eq.s32.totalorder %s27, 1
      %p71 = por %p69, %p70
      %p73 = scmp.ne.s32.totalorder %s58, %s72
      %p74 = scmp.eq.s32.totalorder %s27, 0
      %p75 = por %p73, %p74
      %s77 = sadd.s32 %s76, 1
      %p80 = scmp.eq.s32.totalorder %s21, 1
      %p81 = scmp.ne.s32.totalorder %s76, %s78
      %p82 = scmp.eq.s32.totalorder %s21, 0
      %p83 = por %p81, %p82
      %p84 = scmp.ne.s32.totalorder %s76, %s78
      %p85 = scmp.eq.s32.totalorder %s26, 1
      %p86 = por %p84, %p85
      %p87 = scmp.ne.s32.totalorder %s78, %s79
      %p88 = scmp.eq.s32.totalorder %s26, 0
      %p89 = por %p87, %p88
      %p90 = scmp.ne.s32.totalorder %s78, %s79
      %p91 = scmp.eq.s32.totalorder %s27, 1
      %p92 = por %p90, %p91
      %p94 = scmp.ne.s32.totalorder %s79, %s93
      %p95 = scmp.eq.s32.totalorder %s27, 0
      %p96 = por %p94, %p95
      %s98 = sadd.s32 %s97, 1
      %p101 = scmp.eq.s32.totalorder %s21, 1
      %p102 = scmp.ne.s32.totalorder %s97, %s99
      %p103 = scmp.eq.s32.totalorder %s21, 0
      %p104 = por %p102, %p103
      %p105 = scmp.ne.s32.totalorder %s97, %s99
      %p106 = scmp.eq.s32.totalorder %s26, 1
      %p107 = por %p105, %p106
      %p108 = scmp.ne.s32.totalorder %s99, %s100
      %p109 = scmp.eq.s32.totalorder %s26, 0
      %p110 = por %p108, %p109
      %p111 = scmp.ne.s32.totalorder %s99, %s100
      %p112 = scmp.eq.s32.totalorder %s27, 1
      %p113 = por %p111, %p112
      %p115 = scmp.ne.s32.totalorder %s100, %s114
      %p116 = scmp.eq.s32.totalorder %s27, 0
      %p117 = por %p115, %p116
      %s119 = sadd.s32 %s118, 1
      %p122 = scmp.eq.s32.totalorder %s21, 1
      %p123 = scmp.ne.s32.totalorder %s118, %s120
      %p124 = scmp.eq.s32.totalorder %s21, 0
      %p125 = por %p123, %p124
      %p126 = scmp.ne.s32.totalorder %s118, %s120
      %p127 = scmp.eq.s32.totalorder %s26, 1
      %p128 = por %p126, %p127
      %p129 = scmp.ne.s32.totalorder %s120, %s121
      %p130 = scmp.eq.s32.totalorder %s26, 0
      %p131 = por %p129, %p130
      %p132 = scmp.ne.s32.totalorder %s120, %s121
      %p133 = scmp.eq.s32.totalorder %s27, 1
      %p134 = por %p132, %p133
      %p136 = scmp.ne.s32.totalorder %s121, %s135
      %p137 = scmp.eq.s32.totalorder %s27, 0
      %p138 = por %p136, %p137
      %s140 = sadd.s32 %s139, 1
      %p143 = scmp.eq.s32.totalorder %s21, 1
      %p144 = scmp.ne.s32.totalorder %s139, %s141
      %p145 = scmp.eq.s32.totalorder %s21, 0
      %p146 = por %p144, %p145
      %p147 = scmp.ne.s32.totalorder %s139, %s141
      %p148 = scmp.eq.s32.totalorder %s26, 1
      %p149 = por %p147, %p148
      %p150 = scmp.ne.s32.totalorder %s141, %s142
      %p151 = scmp.eq.s32.totalorder %s26, 0
      %p152 = por %p150, %p151
      %p153 = scmp.ne.s32.totalorder %s141, %s142
      %p154 = scmp.eq.s32.totalorder %s27, 1
      %p155 = por %p153, %p154
      %p157 = scmp.ne.s32.totalorder %s142, %s156
      %p158 = scmp.eq.s32.totalorder %s27, 0
      %p159 = por %p157, %p158
      %s161 = sadd.s32 %s160, 1
      %p164 = scmp.eq.s32.totalorder %s21, 1
      %p165 = scmp.ne.s32.totalorder %s160, %s162
      %p166 = scmp.eq.s32.totalorder %s21, 0
      %p167 = por %p165, %p166
      %p168 = scmp.ne.s32.totalorder %s160, %s162
      %p169 = scmp.eq.s32.totalorder %s26, 1
      %p170 = por %p168, %p169
      %p171 = scmp.ne.s32.totalorder %s162, %s163
      %p172 = scmp.eq.s32.totalorder %s26, 0
      %p173 = por %p171, %p172
      %p174 = scmp.ne.s32.totalorder %s162, %s163
      %p175 = scmp.eq.s32.totalorder %s27, 1
      %p176 = por %p174, %p175
      %p178 = scmp.ne.s32.totalorder %s163, %s177
      %p179 = scmp.eq.s32.totalorder %s27, 0
      %p180 = por %p178, %p179
      %s182 = sadd.s32 %s181, 1
      %p185 = scmp.eq.s32.totalorder %s21, 1
      %p186 = scmp.ne.s32.totalorder %s181, %s183
      %p187 = scmp.eq.s32.totalorder %s21, 0
      %p188 = por %p186, %p187
      %p189 = scmp.ne.s32.totalorder %s181, %s183
      %p190 = scmp.eq.s32.totalorder %s26, 1
      %p191 = por %p189, %p190
      %p192 = scmp.ne.s32.totalorder %s183, %s184
      %p193 = scmp.eq.s32.totalorder %s26, 0
      %p194 = por %p192, %p193
      %p195 = scmp.ne.s32.totalorder %s183, %s184
      %p196 = scmp.eq.s32.totalorder %s27, 1
      %p197 = por %p195, %p196
      %p199 = scmp.ne.s32.totalorder %s184, %s198
      %p200 = scmp.eq.s32.totalorder %s27, 0
      %p201 = por %p199, %p200
      %s202 = ssub.s32 %s21, %s28
      %p203 = scmp.eq.s32.totalorder %s202, 0
      %s205 = sadd.s32 %s204, 1
      %s206 = scalar_select %p203, %s204, %s205
      %p209 = pneg %p203
      %p210 = scmp.eq.s32.totalorder %s21, 1
      %p211 = por %p209, %p210
      %p212 = scmp.ne.s32.totalorder %s204, %s207
      %p213 = scmp.eq.s32.totalorder %s21, 0
      %p214 = por %p212, %p213
      %p215 = scmp.ne.s32.totalorder %s204, %s207
      %p216 = scmp.eq.s32.totalorder %s26, 1
      %p217 = por %p215, %p216
      %p218 = scmp.ne.s32.totalorder %s207, %s208
      %p219 = scmp.eq.s32.totalorder %s26, 0
      %p220 = por %p218, %p219
      %p221 = scmp.ne.s32.totalorder %s207, %s208
      %p222 = scmp.eq.s32.totalorder %s27, 1
      %p223 = por %p221, %p222
      %p225 = scmp.ne.s32.totalorder %s208, %s224
      %p226 = scmp.eq.s32.totalorder %s27, 0
      %p227 = por %p225, %p226
      %p228 = scmp.le.s32.totalorder 1, %s21
      %p229 = scmp.lt.s32.totalorder %s21, 3
      %p230 = pnand %p228, %p229
      %p231 = pneg %p230
      // Predicated region
      $region9: #{tpu_custom_call.1} parent=5 // pred_check
        _
      $region10: #{tpu_custom_call.1} parent=5 // pred_check_branch
        %233 = sbr.rel (%p230) target = $region12
      $region11: #{tpu_custom_call.1} parent=5 // pred_region
        %s234 = ssub.s32 %s21, 1
        // Predicated region
        $region13: #{tpu_custom_call.1} parent=11 // pred_check
          %p235 = pneg %p68
        $region14: #{tpu_custom_call.1} parent=11 // pred_check_branch
          %237 = sbr.rel (%p235) target = $region16
        $region15: #{tpu_custom_call.1} parent=11 // pred_region
          _
        $region16: #{tpu_custom_call.1} parent=11 // pred_fallthru
          _
        // Predicated region
        $region17: #{tpu_custom_call.1} parent=11 // pred_check
          %p238 = pneg %p89
        $region18: #{tpu_custom_call.1} parent=11 // pred_check_branch
          %240 = sbr.rel (%p238) target = $region20
        $region19: #{tpu_custom_call.1} parent=11 // pred_region
          _
        $region20: #{tpu_custom_call.1} parent=11 // pred_fallthru
          _
        // Predicated region
        $region21: #{tpu_custom_call.1} parent=11 // pred_check
          %p241 = pneg %p110
        $region22: #{tpu_custom_call.1} parent=11 // pred_check_branch
          %243 = sbr.rel (%p241) target = $region24
        $region23: #{tpu_custom_call.1} parent=11 // pred_region
          %245 = vsyncadd [#allocation6], 0
          %s246 = sshll.u32 %s3, 4
          %s247 = int_to_ptr.hbm [resolvable:$true] %s246
          %s248 = sshll.u32 [#allocation5], 4
          %s249 = int_to_ptr.vmem [resolvable:$true] %s248
          %254 = dma.hbm_to_vmem [thread:$0]  %s247, 512, %s249, [#allocation6], 128, 128, 8
        $region24: #{tpu_custom_call.1} parent=11 // pred_fallthru
          _
        // Predicated region
        $region25: #{tpu_custom_call.1} parent=11 // pred_check
          %p255 = pneg %p131
        $region26: #{tpu_custom_call.1} parent=11 // pred_check_branch
          %257 = sbr.rel (%p255) target = $region28
        $region27: #{tpu_custom_call.1} parent=11 // pred_region
          _
        $region28: #{tpu_custom_call.1} parent=11 // pred_fallthru
          _
        // Predicated region
        $region29: #{tpu_custom_call.1} parent=11 // pred_check
          %p258 = pneg %p152
        $region30: #{tpu_custom_call.1} parent=11 // pred_check_branch
          %260 = sbr.rel (%p258) target = $region32
        $region31: #{tpu_custom_call.1} parent=11 // pred_region
          %262 = vsyncadd [#allocation6], 0
          %s263 = sshll.u32 %s5, 4
          %s264 = int_to_ptr.hbm [resolvable:$true] %s263
          %s265 = sshll.u32 [#allocation7], 4
          %s266 = int_to_ptr.vmem [resolvable:$true] %s265
          %271 = dma.hbm_to_vmem [thread:$0]  %s264, 2048, %s266, [#allocation6], 128, 128, 8
        $region32: #{tpu_custom_call.1} parent=11 // pred_fallthru
          _
        // Predicated region
        $region33: #{tpu_custom_call.1} parent=11 // pred_check
          %p272 = pneg %p173
        $region34: #{tpu_custom_call.1} parent=11 // pred_check_branch
          %274 = sbr.rel (%p272) target = $region36
        $region35: #{tpu_custom_call.1} parent=11 // pred_region
          _
        $region36: #{tpu_custom_call.1} parent=11 // pred_fallthru
          _
        // Predicated region
        $region37: #{tpu_custom_call.1} parent=11 // pred_check
          %p275 = pneg %p194
        $region38: #{tpu_custom_call.1} parent=11 // pred_check_branch
          %277 = sbr.rel (%p275) target = $region40
        $region39: #{tpu_custom_call.1} parent=11 // pred_region
          _
        $region40: #{tpu_custom_call.1} parent=11 // pred_fallthru
          _
      $region12: #{tpu_custom_call.1} parent=5 // pred_fallthru
        _
      %p278 = scmp.lt.s32.totalorder %s21, 2
      // Predicated region
      $region41: #{tpu_custom_call.1} parent=5 // pred_check
        %p279 = pneg %p278
      $region42: #{tpu_custom_call.1} parent=5 // pred_check_branch
        %281 = sbr.rel (%p279) target = $region44
      $region43: #{tpu_custom_call.1} parent=5 // pred_region
        // Predicated region
        $region45: #{tpu_custom_call.1} parent=43 // pred_check
          %p282 = pneg %p41
        $region46: #{tpu_custom_call.1} parent=43 // pred_check_branch
          %284 = sbr.rel (%p282) target = $region48
        $region47: #{tpu_custom_call.1} parent=43 // pred_region
          %s285 = sand.u32 %s31, 1
          %s286 = scalar_lea.sflag [#allocation3], %s285
          %s287 = sand.u32 %s31, 1
          %s288 = smul.addr %s287, 8
          %s289 = scalar_lea.vmem [#allocation2], %s288
          %291 = vsyncadd %s286, 0
          %s292 = smul.addr %s21, 8
          %s293 = scalar_lea.hbm %s0, %s292
          %s295 = sshll.u32 %s293, 4
          %s296 = int_to_ptr.hbm [resolvable:$true] %s295
          %s297 = sshll.u32 %s289, 4
          %s298 = int_to_ptr.vmem [resolvable:$true] %s297
          %300 = dma.hbm_to_vmem [thread:$0]  %s296, 128, %s298, %s286
        $region48: #{tpu_custom_call.1} parent=43 // pred_fallthru
          _
      $region44: #{tpu_custom_call.1} parent=5 // pred_fallthru
        _
      %p301 = scmp.le.s32.totalorder 1, %s21
      %p302 = scmp.lt.s32.totalorder %s21, 3
      %p303 = pnand %p301, %p302
      %p304 = pneg %p303
      // Predicated region
      $region49: #{tpu_custom_call.1} parent=5 // pred_check
        _
      $region50: #{tpu_custom_call.1} parent=5 // pred_check_branch
        %306 = sbr.rel (%p303) target = $region52
      $region51: #{tpu_custom_call.1} parent=5 // pred_region
        %s307 = ssub.s32 %s21, 1
        %s308 = sand.u32 %s34, 1
        %s309 = scalar_lea.sflag [#allocation3], %s308
        %s310 = sand.u32 %s34, 1
        %s311 = smul.addr %s310, 8
        %s312 = scalar_lea.vmem [#allocation2], %s311
        // Predicated region
        $region53: #{tpu_custom_call.1} parent=51 // pred_check
          %p313 = pneg %p47
        $region54: #{tpu_custom_call.1} parent=51 // pred_check_branch
          %315 = sbr.rel (%p313) target = $region56
        $region55: #{tpu_custom_call.1} parent=51 // pred_region
          %317 = dma.done %s309, 128
        $region56: #{tpu_custom_call.1} parent=51 // pred_fallthru
          _
        // Predicated region
        $region57: #{tpu_custom_call.1} parent=51 // pred_check
          %p318 = pneg %p110
        $region58: #{tpu_custom_call.1} parent=51 // pred_check_branch
          %320 = sbr.rel (%p318) target = $region60
        $region59: #{tpu_custom_call.1} parent=51 // pred_region
          %322 = dma.done [#allocation6], 512
        $region60: #{tpu_custom_call.1} parent=51 // pred_fallthru
          _
        // Predicated region
        $region61: #{tpu_custom_call.1} parent=51 // pred_check
          %p323 = pneg %p152
        $region62: #{tpu_custom_call.1} parent=51 // pred_check_branch
          %325 = sbr.rel (%p323) target = $region64
        $region63: #{tpu_custom_call.1} parent=51 // pred_region
          %327 = dma.done [#allocation6], 2048
        $region64: #{tpu_custom_call.1} parent=51 // pred_fallthru
          _
        %s328 = sand.u32 %s34, 1
        %s329 = scalar_lea.sflag [#allocation3], %s328
        %s330 = sand.u32 %s34, 1
        %s331 = smul.addr %s330, 8
        %s332 = scalar_lea.vmem [#allocation2], %s331
        %p333 = pneg %p47
        %p334 = pneg %p44
        %p335 = pneg %p68
        %p336 = pneg %p65
        %p337 = pneg %p89
        %p338 = pneg %p86
        %p339 = pneg %p110
        %p340 = pneg %p107
        %p341 = pneg %p131
        %p342 = pneg %p128
        %p343 = pneg %p152
        %p344 = pneg %p149
        %p345 = pneg %p173
        %p346 = pneg %p170
        %p347 = pneg %p194
        %p348 = pneg %p191
        %p349 = pneg %p220
        %p350 = pneg %p217
        %s351 = sand.u32 %s207, 1
        %s352 = scalar_lea.sflag [#allocation4], %s351
        %s353 = sand.u32 %s207, 1
        %s354 = smul.addr %s353, 8
        %s355 = scalar_lea.vmem [#allocation8], %s354
        %v356 = vld [vmem:[%s312] sm:$0xff]
        %v357 = vld [vmem:[%s1] sm:$0xff]
        %v358 = vld [vmem:[%s1 + $0x8] sm:$0xff]
        %v359 = vld [vmem:[%s1 + $0x10] sm:$0xff]
        %v360 = vld [vmem:[%s1 + $0x18] sm:$0xff]
        %v361 = vld [vmem:[%s2] sm:$0x1]
        %v363 = vperm.slane %v361, 0
        %vm365 = vcmask 261120
        %v367 = vsel %vm365, %v356, 0
        %369 = vmatpush.msra.mxu0 0.0
        %370 = vmatpush.msra.mxu0 0.0
        %371 = vmatpush.msra.mxu0 0.0
        %372 = vmatpush.msra.mxu0 0.0
        %373 = vmatpush.msra.mxu0 0.0
        %374 = vmatpush.msra.mxu0 0.0
        %375 = vmatpush.msra.mxu0 0.0
        %376 = vmatpush.msra.mxu0 0.0
        %377 = vmatpush.msra.mxu0 0.0
        %378 = vmatpush.msra.mxu0 0.0
        %379 = vmatpush.msra.mxu0 0.0
        %380 = vmatpush.msra.mxu0 0.0
        %381 = vmatpush.msra.mxu0 %v360
        %382 = vmatpush.msra.mxu0 %v359
        %383 = vmatpush.msra.mxu0 %v358
        %384 = vmatpush.msra.mxu0 %v357
        %385 = vmatmul.f32.gmra.mxu0 %v367
        %v386 = vpop.f32.mrf.mxu0
        %v387 = vadd.f32 %v363, %v386
        %388 = vdwg.mxu0
        %v389 = vld [vmem:[#allocation5] sm:$0xff]
        %v390 = vld [vmem:[#allocation5 + $0x8] sm:$0xff]
        %v391 = vld [vmem:[#allocation5 + $0x10] sm:$0xff]
        %v392 = vld [vmem:[#allocation5 + $0x18] sm:$0xff]
        %v393 = vld [vmem:[%s4] sm:$0xff]
        %v394 = vld [vmem:[%s4 + $0x8] sm:$0xff]
        %v395 = vld [vmem:[%s4 + $0x10] sm:$0xff]
        %v396 = vld [vmem:[%s4 + $0x18] sm:$0xff]
        %398 = vset.pattern.permute.xlu0 0
        %399 = vperm.xlu0 %398, %v393
        %v400 = vpop.permute.xlu0 %399
        %403 = vset.pattern.permute.xlu0 0
        %404 = vperm.xlu0 %403, %v394
        %v405 = vpop.permute.xlu0 %404
        %408 = vset.pattern.permute.xlu0 0
        %409 = vperm.xlu0 %408, %v395
        %v410 = vpop.permute.xlu0 %409
        %413 = vset.pattern.permute.xlu0 0
        %414 = vperm.xlu0 %413, %v396
        %v415 = vpop.permute.xlu0 %414
        %v418 = vsel %vm365, %v389, 0
        %v421 = vsel %vm365, %v390, 0
        %v424 = vsel %vm365, %v391, 0
        %v427 = vsel %vm365, %v392, 0
        %429 = vmatpush.xpose.msra.mxu0 0.0
        %430 = vmatpush.xpose.msra.mxu0 0.0
        %431 = vmatpush.xpose.msra.mxu0 0.0
        %432 = vmatpush.xpose.msra.mxu0 0.0
        %433 = vmatpush.xpose.msra.mxu0 0.0
        %434 = vmatpush.xpose.msra.mxu0 0.0
        %435 = vmatpush.xpose.msra.mxu0 0.0
        %436 = vmatpush.xpose.msra.mxu0 0.0
        %437 = vmatpush.xpose.msra.mxu0 0.0
        %438 = vmatpush.xpose.msra.mxu0 0.0
        %439 = vmatpush.xpose.msra.mxu0 0.0
        %440 = vmatpush.xpose.msra.mxu0 0.0
        %441 = vmatpush.xpose.msra.mxu0 0.0
        %442 = vmatpush.xpose.msra.mxu0 0.0
        %443 = vmatpush.xpose.msra.mxu0 0.0
        %444 = vmatpush.xpose.msra.mxu0 %v367
        %445 = vmatmul.f32.gmra.mxu0 %v418
        %v446 = vpop.f32.mrf.mxu0
        %v447 = vadd.f32 %v400, %v446
        %448 = vmatmul.f32.gmra.mxu0 %v421
        %v449 = vpop.f32.mrf.mxu0
        %v450 = vadd.f32 %v405, %v449
        %451 = vmatmul.f32.gmra.mxu0 %v424
        %v452 = vpop.f32.mrf.mxu0
        %v453 = vadd.f32 %v410, %v452
        %454 = vmatmul.f32.gmra.mxu0 %v427
        %v455 = vpop.f32.mrf.mxu0
        %v456 = vadd.f32 %v415, %v455
        %457 = vdwg.mxu0
        %vm458 = vcmask 64512
        %v460 = vsel %vm458, %v387, 0
        %462 = vmatpush.msra.mxu0 0.0
        %463 = vmatpush.msra.mxu0 0.0
        %464 = vmatpush.msra.mxu0 0.0
        %465 = vmatpush.msra.mxu0 0.0
        %466 = vmatpush.msra.mxu0 0.0
        %467 = vmatpush.msra.mxu0 0.0
        %468 = vmatpush.msra.mxu0 0.0
        %469 = vmatpush.msra.mxu0 0.0
        %470 = vmatpush.msra.mxu0 0.0
        %471 = vmatpush.msra.mxu0 0.0
        %472 = vmatpush.msra.mxu0 0.0
        %473 = vmatpush.msra.mxu0 0.0
        %474 = vmatpush.msra.mxu0 0.0
        %475 = vmatpush.msra.mxu0 0.0
        %476 = vmatpush.msra.mxu0 0.0
        %477 = vmatpush.msra.mxu0 %v447
        %478 = vmatmul.f32.gmra.mxu0 %v460
        %v479 = vpop.f32.mrf.mxu0
        %v480 = vadd.f32 0.0, %v479
        %481 = vdwg.mxu0
        %v482 = vsel %vm458, %v480, -inf
        %483 = vmax.xlane.f32.xlu0 %v482
        %v484 = vpop.xlane.xlu0 %483
        %v485 = vsub.f32 %v480, %v484
        %v486 = vmul.f32 %v485, 1.442695
        %v487 = vpow.pop %v486
        %v488 = vsel %vm458, %v487, 0.0
        %489 = vadd.xlane.f32.xlu0 %v488
        %v490 = vpop.xlane.xlu0 %489
        %v491 = vrcp.pop %v490
        %v492 = vmul.f32 %v487, %v491
        %v493 = vld [vmem:[#allocation7] sm:$0xff]
        %v494 = vld [vmem:[#allocation7 + $0x8] sm:$0xff]
        %v495 = vld [vmem:[#allocation7 + $0x10] sm:$0xff]
        %v496 = vld [vmem:[#allocation7 + $0x18] sm:$0xff]
        %v497 = vld [vmem:[%s6] sm:$0x1]
        %v499 = vperm.slane %v497, 0
        %501 = vmatpush.msra.mxu0 0.0
        %502 = vmatpush.msra.mxu0 0.0
        %503 = vmatpush.msra.mxu0 0.0
        %504 = vmatpush.msra.mxu0 0.0
        %505 = vmatpush.msra.mxu0 0.0
        %506 = vmatpush.msra.mxu0 0.0
        %507 = vmatpush.msra.mxu0 0.0
        %508 = vmatpush.msra.mxu0 0.0
        %509 = vmatpush.msra.mxu0 0.0
        %510 = vmatpush.msra.mxu0 0.0
        %511 = vmatpush.msra.mxu0 0.0
        %512 = vmatpush.msra.mxu0 0.0
        %513 = vmatpush.msra.mxu0 %v496
        %514 = vmatpush.msra.mxu0 %v495
        %515 = vmatpush.msra.mxu0 %v494
        %516 = vmatpush.msra.mxu0 %v493
        %517 = vmatmul.f32.gmra.mxu0 %v367
        %v518 = vpop.f32.mrf.mxu0
        %v519 = vadd.f32 %v499, %v518
        %520 = vdwg.mxu0
        %521 = vrot.lane.b32.xlu0 %v387, 120
        %v522 = vpop.permute.xlu0 %521
        %v523 = vsel %vm458, %v522, 0
        %525 = vmatpush.msra.mxu0 0.0
        %526 = vmatpush.msra.mxu0 0.0
        %527 = vmatpush.msra.mxu0 0.0
        %528 = vmatpush.msra.mxu0 0.0
        %529 = vmatpush.msra.mxu0 0.0
        %530 = vmatpush.msra.mxu0 0.0
        %531 = vmatpush.msra.mxu0 0.0
        %532 = vmatpush.msra.mxu0 0.0
        %533 = vmatpush.msra.mxu0 0.0
        %534 = vmatpush.msra.mxu0 0.0
        %535 = vmatpush.msra.mxu0 0.0
        %536 = vmatpush.msra.mxu0 0.0
        %537 = vmatpush.msra.mxu0 0.0
        %538 = vmatpush.msra.mxu0 0.0
        %539 = vmatpush.msra.mxu0 0.0
        %540 = vmatpush.msra.mxu0 %v450
        %541 = vmatmul.f32.gmra.mxu0 %v523
        %v542 = vpop.f32.mrf.mxu0
        %v543 = vadd.f32 0.0, %v542
        %544 = vdwg.mxu0
        %v545 = vsel %vm458, %v543, -inf
        %546 = vmax.xlane.f32.xlu0 %v545
        %v547 = vpop.xlane.xlu0 %546
        %v548 = vsub.f32 %v543, %v547
        %v549 = vmul.f32 %v548, 1.442695
        %v550 = vpow.pop %v549
        %v551 = vsel %vm458, %v550, 0.0
        %552 = vadd.xlane.f32.xlu0 %v551
        %v553 = vpop.xlane.xlu0 %552
        %v554 = vrcp.pop %v553
        %v555 = vmul.f32 %v550, %v554
        %s556 = scalar_lea.vmem [#allocation7], 32
        %v557 = vld [vmem:[%s556] sm:$0xff]
        %v558 = vld [vmem:[%s556 + $0x8] sm:$0xff]
        %v559 = vld [vmem:[%s556 + $0x10] sm:$0xff]
        %v560 = vld [vmem:[%s556 + $0x18] sm:$0xff]
        %s561 = scalar_lea.vmem %s6, 1
        %v562 = vld [vmem:[%s561] sm:$0x1]
        %v564 = vperm.slane %v562, 0
        %566 = vmatpush.msra.mxu0 0.0
        %567 = vmatpush.msra.mxu0 0.0
        %568 = vmatpush.msra.mxu0 0.0
        %569 = vmatpush.msra.mxu0 0.0
        %570 = vmatpush.msra.mxu0 0.0
        %571 = vmatpush.msra.mxu0 0.0
        %572 = vmatpush.msra.mxu0 0.0
        %573 = vmatpush.msra.mxu0 0.0
        %574 = vmatpush.msra.mxu0 0.0
        %575 = vmatpush.msra.mxu0 0.0
        %576 = vmatpush.msra.mxu0 0.0
        %577 = vmatpush.msra.mxu0 0.0
        %578 = vmatpush.msra.mxu0 %v560
        %579 = vmatpush.msra.mxu0 %v559
        %580 = vmatpush.msra.mxu0 %v558
        %581 = vmatpush.msra.mxu0 %v557
        %582 = vmatmul.f32.gmra.mxu0 %v367
        %v583 = vpop.f32.mrf.mxu0
        %v584 = vadd.f32 %v564, %v583
        %585 = vdwg.mxu0
        %v587 = vsel %vm458, %v555, 0
        %589 = vmatpush.msra.mxu0 0.0
        %590 = vmatpush.msra.mxu0 0.0
        %591 = vmatpush.msra.mxu0 0.0
        %592 = vmatpush.msra.mxu0 0.0
        %593 = vmatpush.msra.mxu0 0.0
        %594 = vmatpush.msra.mxu0 0.0
        %595 = vmatpush.msra.mxu0 0.0
        %596 = vmatpush.msra.mxu0 0.0
        %597 = vmatpush.msra.mxu0 0.0
        %598 = vmatpush.msra.mxu0 0.0
        %599 = vmatpush.msra.mxu0 0.0
        %600 = vmatpush.msra.mxu0 0.0
        %601 = vmatpush.msra.mxu0 0.0
        %602 = vmatpush.msra.mxu0 0.0
        %603 = vmatpush.msra.mxu0 0.0
        %604 = vmatpush.msra.mxu0 %v584
        %605 = vmatmul.f32.gmra.mxu0 %v587
        %v606 = vpop.f32.mrf.mxu0
        %v607 = vadd.f32 0.0, %v606
        %608 = vdwg.mxu0
        %v610 = vsel %vm458, %v492, 0
        %612 = vmatpush.msra.mxu0 0.0
        %613 = vmatpush.msra.mxu0 0.0
        %614 = vmatpush.msra.mxu0 0.0
        %615 = vmatpush.msra.mxu0 0.0
        %616 = vmatpush.msra.mxu0 0.0
        %617 = vmatpush.msra.mxu0 0.0
        %618 = vmatpush.msra.mxu0 0.0
        %619 = vmatpush.msra.mxu0 0.0
        %620 = vmatpush.msra.mxu0 0.0
        %621 = vmatpush.msra.mxu0 0.0
        %622 = vmatpush.msra.mxu0 0.0
        %623 = vmatpush.msra.mxu0 0.0
        %624 = vmatpush.msra.mxu0 0.0
        %625 = vmatpush.msra.mxu0 0.0
        %626 = vmatpush.msra.mxu0 0.0
        %627 = vmatpush.msra.mxu0 %v519
        %628 = vmatmul.f32.gmra.mxu0 %v610
        %v629 = vpop.f32.mrf.mxu0
        %v630 = vadd.f32 %v607, %v629
        %631 = vdwg.mxu0
        %632 = vrot.lane.b32.xlu0 %v387, 112
        %v633 = vpop.permute.xlu0 %632
        %v634 = vsel %vm458, %v633, 0
        %636 = vmatpush.msra.mxu0 0.0
        %637 = vmatpush.msra.mxu0 0.0
        %638 = vmatpush.msra.mxu0 0.0
        %639 = vmatpush.msra.mxu0 0.0
        %640 = vmatpush.msra.mxu0 0.0
        %641 = vmatpush.msra.mxu0 0.0
        %642 = vmatpush.msra.mxu0 0.0
        %643 = vmatpush.msra.mxu0 0.0
        %644 = vmatpush.msra.mxu0 0.0
        %645 = vmatpush.msra.mxu0 0.0
        %646 = vmatpush.msra.mxu0 0.0
        %647 = vmatpush.msra.mxu0 0.0
        %648 = vmatpush.msra.mxu0 0.0
        %649 = vmatpush.msra.mxu0 0.0
        %650 = vmatpush.msra.mxu0 0.0
        %651 = vmatpush.msra.mxu0 %v453
        %652 = vmatmul.f32.gmra.mxu0 %v634
        %v653 = vpop.f32.mrf.mxu0
        %v654 = vadd.f32 0.0, %v653
        %655 = vdwg.mxu0
        %v656 = vsel %vm458, %v654, -inf
        %657 = vmax.xlane.f32.xlu0 %v656
        %v658 = vpop.xlane.xlu0 %657
        %v659 = vsub.f32 %v654, %v658
        %v660 = vmul.f32 %v659, 1.442695
        %v661 = vpow.pop %v660
        %v662 = vsel %vm458, %v661, 0.0
        %663 = vadd.xlane.f32.xlu0 %v662
        %v664 = vpop.xlane.xlu0 %663
        %v665 = vrcp.pop %v664
        %v666 = vmul.f32 %v661, %v665
        %s667 = scalar_lea.vmem [#allocation7], 64
        %v668 = vld [vmem:[%s667] sm:$0xff]
        %v669 = vld [vmem:[%s667 + $0x8] sm:$0xff]
        %v670 = vld [vmem:[%s667 + $0x10] sm:$0xff]
        %v671 = vld [vmem:[%s667 + $0x18] sm:$0xff]
        %s672 = scalar_lea.vmem %s6, 2
        %v673 = vld [vmem:[%s672] sm:$0x1]
        %v675 = vperm.slane %v673, 0
        %677 = vmatpush.msra.mxu0 0.0
        %678 = vmatpush.msra.mxu0 0.0
        %679 = vmatpush.msra.mxu0 0.0
        %680 = vmatpush.msra.mxu0 0.0
        %681 = vmatpush.msra.mxu0 0.0
        %682 = vmatpush.msra.mxu0 0.0
        %683 = vmatpush.msra.mxu0 0.0
        %684 = vmatpush.msra.mxu0 0.0
        %685 = vmatpush.msra.mxu0 0.0
        %686 = vmatpush.msra.mxu0 0.0
        %687 = vmatpush.msra.mxu0 0.0
        %688 = vmatpush.msra.mxu0 0.0
        %689 = vmatpush.msra.mxu0 %v671
        %690 = vmatpush.msra.mxu0 %v670
        %691 = vmatpush.msra.mxu0 %v669
        %692 = vmatpush.msra.mxu0 %v668
        %693 = vmatmul.f32.gmra.mxu0 %v367
        %v694 = vpop.f32.mrf.mxu0
        %v695 = vadd.f32 %v675, %v694
        %696 = vdwg.mxu0
        %v698 = vsel %vm458, %v666, 0
        %700 = vmatpush.msra.mxu0 0.0
        %701 = vmatpush.msra.mxu0 0.0
        %702 = vmatpush.msra.mxu0 0.0
        %703 = vmatpush.msra.mxu0 0.0
        %704 = vmatpush.msra.mxu0 0.0
        %705 = vmatpush.msra.mxu0 0.0
        %706 = vmatpush.msra.mxu0 0.0
        %707 = vmatpush.msra.mxu0 0.0
        %708 = vmatpush.msra.mxu0 0.0
        %709 = vmatpush.msra.mxu0 0.0
        %710 = vmatpush.msra.mxu0 0.0
        %711 = vmatpush.msra.mxu0 0.0
        %712 = vmatpush.msra.mxu0 0.0
        %713 = vmatpush.msra.mxu0 0.0
        %714 = vmatpush.msra.mxu0 0.0
        %715 = vmatpush.msra.mxu0 %v695
        %716 = vmatmul.f32.gmra.mxu0 %v698
        %v717 = vpop.f32.mrf.mxu0
        %v718 = vadd.f32 0.0, %v717
        %719 = vdwg.mxu0
        %v720 = vadd.f32 %v630, %v718
        %721 = vrot.lane.b32.xlu0 %v387, 104
        %v722 = vpop.permute.xlu0 %721
        %v723 = vsel %vm458, %v722, 0
        %725 = vmatpush.msra.mxu0 0.0
        %726 = vmatpush.msra.mxu0 0.0
        %727 = vmatpush.msra.mxu0 0.0
        %728 = vmatpush.msra.mxu0 0.0
        %729 = vmatpush.msra.mxu0 0.0
        %730 = vmatpush.msra.mxu0 0.0
        %731 = vmatpush.msra.mxu0 0.0
        %732 = vmatpush.msra.mxu0 0.0
        %733 = vmatpush.msra.mxu0 0.0
        %734 = vmatpush.msra.mxu0 0.0
        %735 = vmatpush.msra.mxu0 0.0
        %736 = vmatpush.msra.mxu0 0.0
        %737 = vmatpush.msra.mxu0 0.0
        %738 = vmatpush.msra.mxu0 0.0
        %739 = vmatpush.msra.mxu0 0.0
        %740 = vmatpush.msra.mxu0 %v456
        %741 = vmatmul.f32.gmra.mxu0 %v723
        %v742 = vpop.f32.mrf.mxu0
        %v743 = vadd.f32 0.0, %v742
        %744 = vdwg.mxu0
        %v745 = vsel %vm458, %v743, -inf
        %746 = vmax.xlane.f32.xlu0 %v745
        %v747 = vpop.xlane.xlu0 %746
        %v748 = vsub.f32 %v743, %v747
        %v749 = vmul.f32 %v748, 1.442695
        %v750 = vpow.pop %v749
        %v751 = vsel %vm458, %v750, 0.0
        %752 = vadd.xlane.f32.xlu0 %v751
        %v753 = vpop.xlane.xlu0 %752
        %v754 = vrcp.pop %v753
        %v755 = vmul.f32 %v750, %v754
        %s756 = scalar_lea.vmem [#allocation7], 96
        %v757 = vld [vmem:[%s756] sm:$0xff]
        %v758 = vld [vmem:[%s756 + $0x8] sm:$0xff]
        %v759 = vld [vmem:[%s756 + $0x10] sm:$0xff]
        %v760 = vld [vmem:[%s756 + $0x18] sm:$0xff]
        %s761 = scalar_lea.vmem %s6, 3
        %v762 = vld [vmem:[%s761] sm:$0x1]
        %v764 = vperm.slane %v762, 0
        %766 = vmatpush.msra.mxu0 0.0
        %767 = vmatpush.msra.mxu0 0.0
        %768 = vmatpush.msra.mxu0 0.0
        %769 = vmatpush.msra.mxu0 0.0
        %770 = vmatpush.msra.mxu0 0.0
        %771 = vmatpush.msra.mxu0 0.0
        %772 = vmatpush.msra.mxu0 0.0
        %773 = vmatpush.msra.mxu0 0.0
        %774 = vmatpush.msra.mxu0 0.0
        %775 = vmatpush.msra.mxu0 0.0
        %776 = vmatpush.msra.mxu0 0.0
        %777 = vmatpush.msra.mxu0 0.0
        %778 = vmatpush.msra.mxu0 %v760
        %779 = vmatpush.msra.mxu0 %v759
        %780 = vmatpush.msra.mxu0 %v758
        %781 = vmatpush.msra.mxu0 %v757
        %782 = vmatmul.f32.gmra.mxu0 %v367
        %v783 = vpop.f32.mrf.mxu0
        %v784 = vadd.f32 %v764, %v783
        %785 = vdwg.mxu0
        %v787 = vsel %vm458, %v755, 0
        %789 = vmatpush.msra.mxu0 0.0
        %790 = vmatpush.msra.mxu0 0.0
        %791 = vmatpush.msra.mxu0 0.0
        %792 = vmatpush.msra.mxu0 0.0
        %793 = vmatpush.msra.mxu0 0.0
        %794 = vmatpush.msra.mxu0 0.0
        %795 = vmatpush.msra.mxu0 0.0
        %796 = vmatpush.msra.mxu0 0.0
        %797 = vmatpush.msra.mxu0 0.0
        %798 = vmatpush.msra.mxu0 0.0
        %799 = vmatpush.msra.mxu0 0.0
        %800 = vmatpush.msra.mxu0 0.0
        %801 = vmatpush.msra.mxu0 0.0
        %802 = vmatpush.msra.mxu0 0.0
        %803 = vmatpush.msra.mxu0 0.0
        %804 = vmatpush.msra.mxu0 %v784
        %805 = vmatmul.f32.gmra.mxu0 %v787
        %v806 = vpop.f32.mrf.mxu0
        %v807 = vadd.f32 0.0, %v806
        %808 = vdwg.mxu0
        %v809 = vadd.f32 %v720, %v807
        %v810 = vld [vmem:[%s7] sm:$0x1]
        %v812 = vperm.slane %v810, 0
        %v814 = vadd.f32 %v809, %v812
        %815 = vst.msk [vmem:[%s355] sm:$0xff] %vm365, %v814
        %s816 = sand.u32 %s207, 1
        %s817 = scalar_lea.sflag [#allocation4], %s816
        %s818 = sand.u32 %s207, 1
        %s819 = smul.addr %s818, 8
        %s820 = scalar_lea.vmem [#allocation8], %s819
        // Predicated region
        $region65: #{tpu_custom_call.1} parent=51 // pred_check
          %p821 = pneg %p217
        $region66: #{tpu_custom_call.1} parent=51 // pred_check_branch
          %823 = sbr.rel (%p821) target = $region68
        $region67: #{tpu_custom_call.1} parent=51 // pred_region
          %825 = vsyncadd %s817, 0
          %s826 = smul.addr %s26, 8
          %s827 = scalar_lea.hbm %s8, %s826
          %s829 = sshll.u32 %s820, 4
          %s830 = int_to_ptr.vmem [resolvable:$true] %s829
          %s831 = sshll.u32 %s827, 4
          %s832 = int_to_ptr.hbm [resolvable:$true] %s831
          %834 = dma.vmem_to_hbm [thread:$0]  %s830, 128, %s832, %s817
        $region68: #{tpu_custom_call.1} parent=51 // pred_fallthru
          _
      $region52: #{tpu_custom_call.1} parent=5 // pred_fallthru
        _
      %p835 = scmp.le.s32.totalorder 2, %s21
      // Predicated region
      $region69: #{tpu_custom_call.1} parent=5 // pred_check
        %p836 = pneg %p835
      $region70: #{tpu_custom_call.1} parent=5 // pred_check_branch
        %838 = sbr.rel (%p836) target = $region72
      $region71: #{tpu_custom_call.1} parent=5 // pred_region
        %s839 = ssub.s32 %s21, 2
        // Predicated region
        $region73: #{tpu_custom_call.1} parent=71 // pred_check
          %p840 = pneg %p223
        $region74: #{tpu_custom_call.1} parent=71 // pred_check_branch
          %842 = sbr.rel (%p840) target = $region76
        $region75: #{tpu_custom_call.1} parent=71 // pred_region
          %s843 = sand.u32 %s208, 1
          %s844 = scalar_lea.sflag [#allocation4], %s843
          %s845 = sand.u32 %s208, 1
          %s846 = smul.addr %s845, 8
          %s847 = scalar_lea.vmem [#allocation8], %s846
          %849 = dma.done %s844, 128
        $region76: #{tpu_custom_call.1} parent=71 // pred_fallthru
          _
      $region72: #{tpu_custom_call.1} parent=5 // pred_fallthru
        _
    $region6: #{tpu_custom_call.1} parent=1 // loop_footer
      %s25 = sadd.s32 1, %s21
    $region7: #{tpu_custom_call.1} parent=1 // loop_footer_branch
      %20 = sbr.rel target = $region3
    $region8: #{tpu_custom_call.1} parent=1 // loop_exit
      _
    %850 = vsyncpa [#allocation3], 1
    %s851 = scalar_lea.sflag [#allocation3], 1
    %852 = vsyncpa %s851, 1
    %853 = vsyncpa [#allocation6], 1
    %854 = vsyncpa [#allocation4], 1
    %s855 = scalar_lea.sflag [#allocation4], 1
    %856 = vsyncpa %s855, 1

</llo_original>
